<compile_context>
chip_gen: v7x
topology: tpu7x:2x2x1
jax: 0.10.0
libtpu: 0.0.40
codegen_flags: <defaults>
</compile_context>

<pallas_src>
import jax
import jax.numpy as jnp
from jax.experimental import pallas as pl
from jax.experimental.pallas import tpu as pltpu

EPS = 1e-8
_MIB = 1024 * 1024


# ----------------------------- budgeting ----------------------------------- #

def _cdiv(a, b):
    return (a + b - 1) // b


def _round_up(a, m):
    return _cdiv(a, m) * m


def _device_kind():
    try:
        return jax.devices()[0].device_kind.lower()
    except Exception:
        return ""


def _vmem_capacity_bytes():
    try:
        return int(pltpu.get_tpu_info().vmem_capacity_bytes)
    except Exception:
        # Conservative fallback: v7x has 64 MiB per TensorCore, older parts 128 MiB.
        return 64 * _MIB if "v7" in _device_kind() else 128 * _MIB


_VMEM_CAP = _vmem_capacity_bytes()
# Explicit scoped-VMEM limit: ~48 MiB on v7x (64 MiB physical), ~96 MiB on
# v5e/v6e (128 MiB physical).  The block budget leaves headroom under the
# limit for compiler scratch / vreg spills.
_VMEM_LIMIT_BYTES = min((_VMEM_CAP * 3) // 4, 96 * _MIB)
_VMEM_BLOCK_BUDGET = max(8 * _MIB, _VMEM_LIMIT_BYTES - 8 * _MIB)

# Multi-TensorCore parts (v7x: 2 TC/chip; v4/v5p megacore): keep an even,
# >= 2-step grid so the "parallel" batch axis shards evenly across cores.
_MULTI_CORE = any(k in _device_kind() for k in ("v7", "v4", "v5p"))


def _padded_bytes(shape, dtype):
    """VMEM footprint of one buffer slice: last dim padded to 128 lanes,
    second-to-last padded to the sublane packing for `dtype`."""
    itemsize = jnp.dtype(dtype).itemsize
    sublane = 8 * max(1, 4 // itemsize)          # 8 f32, 16 bf16, 32 int8
    dims = list(shape)
    dims[-1] = _round_up(dims[-1], 128)
    if len(dims) >= 2:
        dims[-2] = _round_up(dims[-2], sublane)
    n = 1
    for d in dims:
        n *= d
    return n * itemsize


def _choose_tiling(B, per_b_bytes, const_bytes):
    """Pick (block_b, grid_steps, padded_B).  `per_b_bytes` already counts the
    double-buffered, VMEM-padded footprint of every per-batch-element buffer."""
    avail = max(per_b_bytes, _VMEM_BLOCK_BUDGET - const_bytes)
    max_bb = max(1, avail // per_b_bytes)
    if _MULTI_CORE and B > 1:
        steps = max(2, _cdiv(B, max_bb))
        if steps % 2:
            steps += 1
    else:
        steps = _cdiv(B, max_bb)
    steps = max(1, steps)
    bb = _cdiv(B, steps)
    return bb, steps, bb * steps


def _compiler_params():
    return pltpu.CompilerParams(
        dimension_semantics=("parallel",),
        vmem_limit_bytes=_VMEM_LIMIT_BYTES,
    )


# ----------------------------- kernels ------------------------------------- #

def _fwd_kernel(x_ref, gamma_ref, beta_ref, out_ref, avg_ref, var_ref):
    """Lane-dense block: x/out (bb, N, T); gamma/beta (1, N, 1) f32;
    avg/var (bb, N, 1) f32.  One-pass mean/var reduced over the T (lane) axis."""
    x = x_ref[...].astype(jnp.float32)
    t = x.shape[-1]
    s1 = jnp.sum(x, axis=-1, keepdims=True)
    s2 = jnp.sum(x * x, axis=-1, keepdims=True)
    mean = s1 * jnp.float32(1.0 / t)
    # unbiased variance (torch.var default): (sum(x^2) - T*mean^2) / (T-1)
    var = (s2 - mean * s1) * jnp.float32(1.0 / max(t - 1, 1))
    var = jnp.maximum(var, 0.0)                  # guard f32 cancellation
    scale = jax.lax.rsqrt(var + EPS) * gamma_ref[...]        # (bb, N, 1)
    shift = beta_ref[...] - mean * scale
    out_ref[...] = (x * scale + shift).astype(out_ref.dtype)
    avg_ref[...] = mean
    var_ref[...] = var


def _fwd_fused_kernel(x_ref, dec_ref, gamma_ref, beta_ref,
                      out_ref, dec_out_ref, avg_ref, var_ref):
    """Forward + dec_inp normalization fused; stats reused from vregs."""
    x = x_ref[...].astype(jnp.float32)
    t = x.shape[-1]
    s1 = jnp.sum(x, axis=-1, keepdims=True)
    s2 = jnp.sum(x * x, axis=-1, keepdims=True)
    mean = s1 * jnp.float32(1.0 / t)
    var = (s2 - mean * s1) * jnp.float32(1.0 / max(t - 1, 1))
    var = jnp.maximum(var, 0.0)
    scale = jax.lax.rsqrt(var + EPS) * gamma_ref[...]
    shift = beta_ref[...] - mean * scale
    out_ref[...] = (x * scale + shift).astype(out_ref.dtype)
    dec = dec_ref[...].astype(jnp.float32)
    dec_out_ref[...] = (dec * scale + shift).astype(dec_out_ref.dtype)
    avg_ref[...] = mean
    var_ref[...] = var


def _inverse_kernel(x_ref, avg_ref, var_ref, gamma_ref, beta_ref, out_ref):
    """inverse_process: (x - beta)/gamma * sqrt(var + eps) + avg, rewritten as
    x * coeff + (avg - beta*coeff) with per-(b, n) coeff."""
    x = x_ref[...].astype(jnp.float32)
    coeff = jnp.sqrt(var_ref[...] + EPS) / gamma_ref[...]    # (bb, N, 1)
    shift = avg_ref[...] - beta_ref[...] * coeff
    out_ref[...] = (x * coeff + shift).astype(out_ref.dtype)


# ----------------------------- wrappers ------------------------------------ #

@jax.jit
def revin_forward(batch_x, gamma, beta):
    """batch_x: (B, T, N). Returns (normalized (B,T,N), avg (B,1,N), var (B,1,N))."""
    B, T, N = batch_x.shape
    xdt = batch_x.dtype
    x = jnp.transpose(batch_x, (0, 2, 1))                    # (B, N, T) lane-dense
    g = gamma.reshape(1, N, 1).astype(jnp.float32)
    b = beta.reshape(1, N, 1).astype(jnp.float32)

    per_b = 2 * (2 * _padded_bytes((1, N, T), xdt)           # x + out
                 + 2 * _padded_bytes((1, N, 1), jnp.float32))  # avg + var
    const = 2 * 2 * _padded_bytes((1, N, 1), jnp.float32)    # gamma + beta
    bb, steps, b_pad = _choose_tiling(B, per_b, const)
    if b_pad > B:
        x = jnp.pad(x, ((0, b_pad - B), (0, 0), (0, 0)))

    out, avg, var = pl.pallas_call(
        _fwd_kernel,
        out_shape=(
            jax.ShapeDtypeStruct((b_pad, N, T), xdt),
            jax.ShapeDtypeStruct((b_pad, N, 1), jnp.float32),
            jax.ShapeDtypeStruct((b_pad, N, 1), jnp.float32),
        ),
        grid_spec=pltpu.PrefetchScalarGridSpec(
            num_scalar_prefetch=0,
            grid=(steps,),
            in_specs=[
                pl.BlockSpec((bb, N, T), lambda i: (i, 0, 0)),
                pl.BlockSpec((1, N, 1), lambda i: (0, 0, 0)),
                pl.BlockSpec((1, N, 1), lambda i: (0, 0, 0)),
            ],
            out_specs=[
                pl.BlockSpec((bb, N, T), lambda i: (i, 0, 0)),
                pl.BlockSpec((bb, N, 1), lambda i: (i, 0, 0)),
                pl.BlockSpec((bb, N, 1), lambda i: (i, 0, 0)),
            ],
        ),
        compiler_params=_compiler_params(),
    )(x, g, b)

    out = jnp.transpose(out[:B], (0, 2, 1))
    avg = jnp.transpose(avg[:B], (0, 2, 1))
    var = jnp.transpose(var[:B], (0, 2, 1))
    return out, avg, var


@jax.jit
def revin_forward_fused(batch_x, dec_inp, gamma, beta):
    """Returns (normalized_x, normalized_dec, avg (B,1,N), var (B,1,N))."""
    B, T, N = batch_x.shape
    _, Td, _ = dec_inp.shape
    xdt, ddt = batch_x.dtype, dec_inp.dtype
    x = jnp.transpose(batch_x, (0, 2, 1))                    # (B, N, T)
    d = jnp.transpose(dec_inp, (0, 2, 1))                    # (B, N, Td)
    g = gamma.reshape(1, N, 1).astype(jnp.float32)
    b = beta.reshape(1, N, 1).astype(jnp.float32)

    per_b = 2 * (2 * _padded_bytes((1, N, T), xdt)
                 + 2 * _padded_bytes((1, N, Td), ddt)
                 + 2 * _padded_bytes((1, N, 1), jnp.float32))
    const = 2 * 2 * _padded_bytes((1, N, 1), jnp.float32)
    bb, steps, b_pad = _choose_tiling(B, per_b, const)
    if b_pad > B:
        x = jnp.pad(x, ((0, b_pad - B), (0, 0), (0, 0)))
        d = jnp.pad(d, ((0, b_pad - B), (0, 0), (0, 0)))

    out, dec_out, avg, var = pl.pallas_call(
        _fwd_fused_kernel,
        out_shape=(
            jax.ShapeDtypeStruct((b_pad, N, T), xdt),
            jax.ShapeDtypeStruct((b_pad, N, Td), ddt),
            jax.ShapeDtypeStruct((b_pad, N, 1), jnp.float32),
            jax.ShapeDtypeStruct((b_pad, N, 1), jnp.float32),
        ),
        grid_spec=pltpu.PrefetchScalarGridSpec(
            num_scalar_prefetch=0,
            grid=(steps,),
            in_specs=[
                pl.BlockSpec((bb, N, T), lambda i: (i, 0, 0)),
                pl.BlockSpec((bb, N, Td), lambda i: (i, 0, 0)),
                pl.BlockSpec((1, N, 1), lambda i: (0, 0, 0)),
                pl.BlockSpec((1, N, 1), lambda i: (0, 0, 0)),
            ],
            out_specs=[
                pl.BlockSpec((bb, N, T), lambda i: (i, 0, 0)),
                pl.BlockSpec((bb, N, Td), lambda i: (i, 0, 0)),
                pl.BlockSpec((bb, N, 1), lambda i: (i, 0, 0)),
                pl.BlockSpec((bb, N, 1), lambda i: (i, 0, 0)),
            ],
        ),
        compiler_params=_compiler_params(),
    )(x, d, g, b)

    out = jnp.transpose(out[:B], (0, 2, 1))
    dec_out = jnp.transpose(dec_out[:B], (0, 2, 1))
    avg = jnp.transpose(avg[:B], (0, 2, 1))
    var = jnp.transpose(var[:B], (0, 2, 1))
    return out, dec_out, avg, var


@jax.jit
def revin_inverse(batch_x, avg, var, gamma, beta):
    """batch_x: (B, T, N); avg/var: (B, 1, N) f32. Returns de-normalized (B, T, N)."""
    B, T, N = batch_x.shape
    xdt = batch_x.dtype
    x = jnp.transpose(batch_x, (0, 2, 1))                    # (B, N, T)
    a = jnp.transpose(avg, (0, 2, 1)).astype(jnp.float32)    # (B, N, 1)
    v = jnp.transpose(var, (0, 2, 1)).astype(jnp.float32)
    g = gamma.reshape(1, N, 1).astype(jnp.float32)
    b = beta.reshape(1, N, 1).astype(jnp.float32)

    per_b = 2 * (2 * _padded_bytes((1, N, T), xdt)
                 + 2 * _padded_bytes((1, N, 1), jnp.float32))
    const = 2 * 2 * _padded_bytes((1, N, 1), jnp.float32)
    bb, steps, b_pad = _choose_tiling(B, per_b, const)
    if b_pad > B:
        pad = ((0, b_pad - B), (0, 0), (0, 0))
        x, a, v = jnp.pad(x, pad), jnp.pad(a, pad), jnp.pad(v, pad)

    out = pl.pallas_call(
        _inverse_kernel,
        out_shape=jax.ShapeDtypeStruct((b_pad, N, T), xdt),
        grid_spec=pltpu.PrefetchScalarGridSpec(
            num_scalar_prefetch=0,
            grid=(steps,),
            in_specs=[
                pl.BlockSpec((bb, N, T), lambda i: (i, 0, 0)),
                pl.BlockSpec((bb, N, 1), lambda i: (i, 0, 0)),
                pl.BlockSpec((bb, N, 1), lambda i: (i, 0, 0)),
                pl.BlockSpec((1, N, 1), lambda i: (0, 0, 0)),
                pl.BlockSpec((1, N, 1), lambda i: (0, 0, 0)),
            ],
            out_specs=pl.BlockSpec((bb, N, T), lambda i: (i, 0, 0)),
        ),
        compiler_params=_compiler_params(),
    )(x, a, v, g, b)

    return jnp.transpose(out[:B], (0, 2, 1))


class RevIN:
    """JAX/Pallas port of models/RevIN.py Model (args.affine=True)."""

    def __init__(self, n_series, affine=True):
        self.affine = affine
        self.gamma = jnp.ones((n_series,), jnp.float32)
        self.beta = jnp.zeros((n_series,), jnp.float32)
        self.avg = None
        self.var = None

    def __call__(self, batch_x, mode='forward', dec_inp=None):
        if mode == 'forward':
            if dec_inp is None:
                out, avg, var = revin_forward(batch_x, self.gamma, self.beta)
                self.avg, self.var = avg, var
                return out, None
            out, dec_out, avg, var = revin_forward_fused(
                batch_x, dec_inp, self.gamma, self.beta)
            self.avg, self.var = avg, var
            return out, dec_out
        elif mode == 'inverse':
            return revin_inverse(batch_x, self.avg, self.var,
                                 self.gamma, self.beta)
        raise ValueError(f"unknown mode: {mode}")


# ------------------------------ reference ---------------------------------- #

def _ref_forward(x, gamma, beta):
    avg = jnp.mean(x, axis=1, keepdims=True)
    var = jnp.var(x, axis=1, keepdims=True, ddof=1)   # unbiased, like torch
    y = (x - avg) / jnp.sqrt(var + EPS)
    return y * gamma + beta, avg, var


if __name__ == "__main__":
    key = jax.random.PRNGKey(0)
    k1, k2, k3, k4 = jax.random.split(key, 4)

    # Shapes consistent with the module: batch=2, seq=16, n_series=8, dec seq=8.
    B, T, N = 2, 16, 8
    Td = 8
    batch_x = jax.random.normal(k1, (B, T, N), jnp.float32) * 3.0 + 1.5
    dec_inp = jax.random.normal(k2, (B, Td, N), jnp.float32)

    model = RevIN(n_series=N, affine=True)

    # forward mode (fused dec_inp path)
    out_x, out_dec = model(batch_x, mode='forward', dec_inp=dec_inp)
    out_x = jax.block_until_ready(out_x)
    out_dec = jax.block_until_ready(out_dec)

    # inverse mode (should approximately recover batch_x)
    recon = jax.block_until_ready(model(out_x, mode='inverse'))

    ref_x, ref_avg, ref_var = _ref_forward(batch_x, model.gamma, model.beta)
    ref_dec = ((dec_inp - ref_avg) / jnp.sqrt(ref_var + EPS)) * model.gamma + model.beta

    assert jnp.allclose(out_x, ref_x, atol=1e-4, rtol=1e-5)
    assert jnp.allclose(out_dec, ref_dec, atol=1e-4, rtol=1e-5)
    assert jnp.allclose(model.avg, ref_avg, atol=1e-4, rtol=1e-5)
    assert jnp.allclose(model.var, ref_var, atol=1e-4, rtol=1e-4)
    assert jnp.allclose(recon, batch_x, atol=1e-4, rtol=1e-4)

    # Second shape: no-dec_inp path, longer T (lane-dense reduction).
    B2, T2, N2 = 8, 96, 7
    x2 = jax.random.normal(k3, (B2, T2, N2), jnp.float32) * 0.7 - 0.2
    model2 = RevIN(n_series=N2, affine=True)
    out2, none_dec = model2(x2, mode='forward', dec_inp=None)
    out2 = jax.block_until_ready(out2)
    assert none_dec is None
    ref2, _, _ = _ref_forward(x2, model2.gamma, model2.beta)
    assert jnp.allclose(out2, ref2, atol=1e-4, rtol=1e-5)
    recon2 = jax.block_until_ready(model2(out2, mode='inverse'))
    assert jnp.allclose(recon2, x2, atol=1e-4, rtol=1e-4)

    # Third shape: awkward (odd/prime) batch exercises the batch-padding path.
    B3, T3, N3 = 3, 32, 5
    x3 = jax.random.normal(k4, (B3, T3, N3), jnp.float32) * 2.0 + 0.5
    model3 = RevIN(n_series=N3, affine=True)
    out3, _ = model3(x3, mode='forward', dec_inp=None)
    out3 = jax.block_until_ready(out3)
    ref3, _, _ = _ref_forward(x3, model3.gamma, model3.beta)
    assert jnp.allclose(out3, ref3, atol=1e-4, rtol=1e-5)
    recon3 = jax.block_until_ready(model3(out3, mode='inverse'))
    assert jnp.allclose(recon3, x3, atol=1e-4, rtol=1e-4)

    print("KERNEL_OK")
</pallas_src>

<mosaic_0001>
module attributes {stable_mosaic.version = 11 : i64} {
  func.func @_fwd_fused_kernel(%arg0: i32, %arg1: memref<2x8x16xf32, #tpu.memory_space<vmem>>, %arg2: memref<2x8x8xf32, #tpu.memory_space<vmem>>, %arg3: memref<1x8x1xf32, #tpu.memory_space<vmem>>, %arg4: memref<1x8x1xf32, #tpu.memory_space<vmem>>, %arg5: memref<2x8x16xf32, #tpu.memory_space<vmem>>, %arg6: memref<2x8x8xf32, #tpu.memory_space<vmem>>, %arg7: memref<2x8x1xf32, #tpu.memory_space<vmem>>, %arg8: memref<2x8x1xf32, #tpu.memory_space<vmem>>) attributes {dimension_semantics = [#tpu.dimension_semantics<parallel>], iteration_bounds = array<i64: 1>, scalar_prefetch = 0 : i64, scratch_operands = 0 : i64, tpu.core_type = #tpu.core_type<tc>, window_params = [{transform_indices = @transform_0, window_bounds = array<i64: 2, 8, 16>}, {transform_indices = @transform_1, window_bounds = array<i64: 2, 8, 8>}, {pipeline_mode = #tpu.pipeline_mode<synchronous>, transform_indices = @transform_2, window_bounds = array<i64: 1, 8, 1>}, {pipeline_mode = #tpu.pipeline_mode<synchronous>, transform_indices = @transform_3, window_bounds = array<i64: 1, 8, 1>}, {transform_indices = @transform_4, window_bounds = array<i64: 2, 8, 16>}, {transform_indices = @transform_5, window_bounds = array<i64: 2, 8, 8>}, {transform_indices = @transform_6, window_bounds = array<i64: 2, 8, 1>}, {transform_indices = @transform_7, window_bounds = array<i64: 2, 8, 1>}]} {
    %c0 = arith.constant 0 : index
    %c0_0 = arith.constant 0 : index
    %c0_1 = arith.constant 0 : index
    %0 = vector.load %arg1[%c0, %c0_0, %c0_1] : memref<2x8x16xf32, #tpu.memory_space<vmem>>, vector<2x8x16xf32>
    %cst = arith.constant dense<0.000000e+00> : vector<2x8xf32>
    %1 = vector.multi_reduction <add>, %0, %cst [2] : vector<2x8x16xf32> to vector<2x8xf32>
    %2 = vector.shape_cast %1 : vector<2x8xf32> to vector<2x8x1xf32>
    %3 = arith.mulf %0, %0 : vector<2x8x16xf32>
    %cst_2 = arith.constant dense<0.000000e+00> : vector<2x8xf32>
    %4 = vector.multi_reduction <add>, %3, %cst_2 [2] : vector<2x8x16xf32> to vector<2x8xf32>
    %5 = vector.shape_cast %4 : vector<2x8xf32> to vector<2x8x1xf32>
    %cst_3 = arith.constant 6.250000e-02 : f32
    %6 = vector.broadcast %cst_3 : f32 to vector<2x8x1xf32>
    %7 = arith.mulf %2, %6 : vector<2x8x1xf32>
    %8 = arith.mulf %7, %2 : vector<2x8x1xf32>
    %9 = arith.subf %5, %8 : vector<2x8x1xf32>
    %cst_4 = arith.constant 0.0666666701 : f32
    %10 = vector.broadcast %cst_4 : f32 to vector<2x8x1xf32>
    %11 = arith.mulf %9, %10 : vector<2x8x1xf32>
    %cst_5 = arith.constant 0.000000e+00 : f32
    %12 = vector.broadcast %cst_5 : f32 to vector<2x8x1xf32>
    %13 = arith.maximumf %11, %12 : vector<2x8x1xf32>
    %cst_6 = arith.constant 9.99999993E-9 : f32
    %14 = vector.broadcast %cst_6 : f32 to vector<2x8x1xf32>
    %15 = arith.addf %13, %14 : vector<2x8x1xf32>
    %16 = math.rsqrt %15 : vector<2x8x1xf32>
    %c0_7 = arith.constant 0 : index
    %c0_8 = arith.constant 0 : index
    %c0_9 = arith.constant 0 : index
    %17 = vector.load %arg3[%c0_7, %c0_8, %c0_9] : memref<1x8x1xf32, #tpu.memory_space<vmem>>, vector<1x8x1xf32>
    %18 = vector.broadcast %17 : vector<1x8x1xf32> to vector<2x8x1xf32>
    %19 = arith.mulf %16, %18 : vector<2x8x1xf32>
    %c0_10 = arith.constant 0 : index
    %c0_11 = arith.constant 0 : index
    %c0_12 = arith.constant 0 : index
    %20 = vector.load %arg4[%c0_10, %c0_11, %c0_12] : memref<1x8x1xf32, #tpu.memory_space<vmem>>, vector<1x8x1xf32>
    %21 = arith.mulf %7, %19 : vector<2x8x1xf32>
    %22 = vector.broadcast %20 : vector<1x8x1xf32> to vector<2x8x1xf32>
    %23 = arith.subf %22, %21 : vector<2x8x1xf32>
    %24 = vector.broadcast %19 : vector<2x8x1xf32> to vector<2x8x16xf32>
    %25 = arith.mulf %0, %24 : vector<2x8x16xf32>
    %26 = vector.broadcast %23 : vector<2x8x1xf32> to vector<2x8x16xf32>
    %27 = arith.addf %25, %26 : vector<2x8x16xf32>
    %c0_13 = arith.constant 0 : index
    %c0_14 = arith.constant 0 : index
    %c0_15 = arith.constant 0 : index
    %28 = vector.load %arg5[%c0_13, %c0_14, %c0_15] : memref<2x8x16xf32, #tpu.memory_space<vmem>>, vector<2x8x16xf32>
    tpu.vector_store %arg5[%c0_13, %c0_14, %c0_15], %27 {strides = array<i32>} : memref<2x8x16xf32, #tpu.memory_space<vmem>>, vector<2x8x16xf32>,
    %c0_16 = arith.constant 0 : index
    %c0_17 = arith.constant 0 : index
    %c0_18 = arith.constant 0 : index
    %29 = vector.load %arg2[%c0_16, %c0_17, %c0_18] : memref<2x8x8xf32, #tpu.memory_space<vmem>>, vector<2x8x8xf32>
    %30 = vector.broadcast %19 : vector<2x8x1xf32> to vector<2x8x8xf32>
    %31 = arith.mulf %29, %30 : vector<2x8x8xf32>
    %32 = vector.broadcast %23 : vector<2x8x1xf32> to vector<2x8x8xf32>
    %33 = arith.addf %31, %32 : vector<2x8x8xf32>
    %c0_19 = arith.constant 0 : index
    %c0_20 = arith.constant 0 : index
    %c0_21 = arith.constant 0 : index
    %34 = vector.load %arg6[%c0_19, %c0_20, %c0_21] : memref<2x8x8xf32, #tpu.memory_space<vmem>>, vector<2x8x8xf32>
    tpu.vector_store %arg6[%c0_19, %c0_20, %c0_21], %33 {strides = array<i32>} : memref<2x8x8xf32, #tpu.memory_space<vmem>>, vector<2x8x8xf32>,
    %c0_22 = arith.constant 0 : index
    %c0_23 = arith.constant 0 : index
    %c0_24 = arith.constant 0 : index
    %35 = vector.load %arg7[%c0_22, %c0_23, %c0_24] : memref<2x8x1xf32, #tpu.memory_space<vmem>>, vector<2x8x1xf32>
    tpu.vector_store %arg7[%c0_22, %c0_23, %c0_24], %7 {strides = array<i32>} : memref<2x8x1xf32, #tpu.memory_space<vmem>>, vector<2x8x1xf32>,
    %c0_25 = arith.constant 0 : index
    %c0_26 = arith.constant 0 : index
    %c0_27 = arith.constant 0 : index
    %36 = vector.load %arg8[%c0_25, %c0_26, %c0_27] : memref<2x8x1xf32, #tpu.memory_space<vmem>>, vector<2x8x1xf32>
    tpu.vector_store %arg8[%c0_25, %c0_26, %c0_27], %13 {strides = array<i32>} : memref<2x8x1xf32, #tpu.memory_space<vmem>>, vector<2x8x1xf32>,
    return
  }
  func.func @transform_0(%arg0: i32) -> (i32, i32, i32) {
    %c0_i32 = arith.constant 0 : i32
    %c0_i32_0 = arith.constant 0 : i32
    %c0_i32_1 = arith.constant 0 : i32
    return %arg0, %c0_i32, %c0_i32_0 : i32, i32, i32
  }
  func.func @transform_1(%arg0: i32) -> (i32, i32, i32) {
    %c0_i32 = arith.constant 0 : i32
    %c0_i32_0 = arith.constant 0 : i32
    %c0_i32_1 = arith.constant 0 : i32
    return %arg0, %c0_i32, %c0_i32_0 : i32, i32, i32
  }
  func.func @transform_2(%arg0: i32) -> (i32, i32, i32) {
    %c0_i32 = arith.constant 0 : i32
    %c0_i32_0 = arith.constant 0 : i32
    %c0_i32_1 = arith.constant 0 : i32
    %c0_i32_2 = arith.constant 0 : i32
    return %c0_i32, %c0_i32_0, %c0_i32_1 : i32, i32, i32
  }
  func.func @transform_3(%arg0: i32) -> (i32, i32, i32) {
    %c0_i32 = arith.constant 0 : i32
    %c0_i32_0 = arith.constant 0 : i32
    %c0_i32_1 = arith.constant 0 : i32
    %c0_i32_2 = arith.constant 0 : i32
    return %c0_i32, %c0_i32_0, %c0_i32_1 : i32, i32, i32
  }
  func.func @transform_4(%arg0: i32) -> (i32, i32, i32) {
    %c0_i32 = arith.constant 0 : i32
    %c0_i32_0 = arith.constant 0 : i32
    %c0_i32_1 = arith.constant 0 : i32
    return %arg0, %c0_i32, %c0_i32_0 : i32, i32, i32
  }
  func.func @transform_5(%arg0: i32) -> (i32, i32, i32) {
    %c0_i32 = arith.constant 0 : i32
    %c0_i32_0 = arith.constant 0 : i32
    %c0_i32_1 = arith.constant 0 : i32
    return %arg0, %c0_i32, %c0_i32_0 : i32, i32, i32
  }
  func.func @transform_6(%arg0: i32) -> (i32, i32, i32) {
    %c0_i32 = arith.constant 0 : i32
    %c0_i32_0 = arith.constant 0 : i32
    %c0_i32_1 = arith.constant 0 : i32
    return %arg0, %c0_i32, %c0_i32_0 : i32, i32, i32
  }
  func.func @transform_7(%arg0: i32) -> (i32, i32, i32) {
    %c0_i32 = arith.constant 0 : i32
    %c0_i32_0 = arith.constant 0 : i32
    %c0_i32_1 = arith.constant 0 : i32
    return %arg0, %c0_i32, %c0_i32_0 : i32, i32, i32
  }
}

</mosaic_0001>

<llo_original>
// kernel: revin_forward_fused.1
$region0: #{revin_forward_fused.1}
  #allocation0 [shape = 'u32[]', space=smem, size = 0x4, offset = 0x4, fixed_abs, tag = 'smem constant byte address 0x4 - core index']
  #allocation1 [shape = 'u32[144,128]{1,0:T(1,128)}', space=vmem, size = 0x12000, scoped, tag = 'internal scratch']
  %s0 = inlined_call_operand.hbm [shape: f32[2,8,16], index: 0, kind: input, shape index: {}]
  %s1 = inlined_call_operand.hbm [shape: f32[2,8,8], index: 1, kind: input, shape index: {}]
  %s2 = inlined_call_operand.hbm [shape: f32[1,8,1], index: 2, kind: input, shape index: {}]
  %s3 = inlined_call_operand.hbm [shape: f32[1,8,1], index: 3, kind: input, shape index: {}]
  %s4 = inlined_call_operand.hbm [shape: f32[2,8,16], index: 4, kind: output, shape index: {0}]
  %s5 = inlined_call_operand.hbm [shape: f32[2,8,8], index: 5, kind: output, shape index: {1}]
  %s6 = inlined_call_operand.hbm [shape: f32[2,8,1], index: 6, kind: output, shape index: {2}]
  %s7 = inlined_call_operand.hbm [shape: f32[2,8,1], index: 7, kind: output, shape index: {3}]
  %8 = xla_tuple %s4, %s5, %s6, %s7
  %s9 = sld [smem:[#allocation0]]
  $region66: #{revin_forward_fused.1} parent=0
    _
  %s11 = ssub.s32 1, %s9
  %s12 = scalar_select 0, %s11, %s9
  $region1: #{revin_forward_fused.1} parent=0
    #allocation2 [shape = 'u8[8192]{0}', space=vmem, size = 0x2000, scoped, tag = 'input window, operand 0, single buffered']
    #allocation3 [shape = 's32[1]{0}', space=sflag, size = 0x4, scoped, tag = 'scoped memory for revin_forward_fused.1']
    #allocation4 [shape = 's32[1]{0}', space=sflag, size = 0x4, scoped, tag = 'scoped memory for revin_forward_fused.1']
    #allocation5 [shape = 'u8[8192]{0}', space=vmem, size = 0x2000, scoped, tag = 'input window, operand 1, single buffered']
    #allocation6 [shape = 's32[1]{0}', space=sflag, size = 0x4, scoped, tag = 'scoped memory for revin_forward_fused.1']
    #allocation7 [shape = 'u8[4096]{0}', space=vmem, size = 0x1000, scoped, tag = 'input window, operand 2, single buffered']
    #allocation8 [shape = 'u8[4096]{0}', space=vmem, size = 0x1000, scoped, tag = 'input window, operand 3, single buffered']
    #allocation9 [shape = 's32[1]{0}', space=sflag, size = 0x4, scoped, tag = 'scoped memory for revin_forward_fused.1']
    #allocation10 [shape = 'u8[8192]{0}', space=vmem, size = 0x2000, scoped, tag = 'output window, operand 0, single buffered']
    #allocation11 [shape = 'u8[8192]{0}', space=vmem, size = 0x2000, scoped, tag = 'output window, operand 1, single buffered']
    #allocation12 [shape = 's32[1]{0}', space=sflag, size = 0x4, scoped, tag = 'scoped memory for revin_forward_fused.1']
    #allocation13 [shape = 'u8[8192]{0}', space=vmem, size = 0x2000, scoped, tag = 'output window, operand 2, single buffered']
    #allocation14 [shape = 'u8[8192]{0}', space=vmem, size = 0x2000, scoped, tag = 'output window, operand 3, single buffered']
    #allocation15 [shape = 's32[1]{0}', space=sflag, size = 0x4, scoped, tag = 'scoped memory for revin_forward_fused.1']
    %13 = vsyncpa [#allocation3], 0
    %14 = vsyncpa [#allocation6], 0
    %15 = vsyncpa [#allocation9], 0
    %16 = vsyncpa [#allocation4], 0
    %17 = vsyncpa [#allocation12], 0
    %18 = vsyncpa [#allocation15], 0
    // Predicated region
    $region2: #{revin_forward_fused.1} parent=1 // pred_check
      _
    $region3: #{revin_forward_fused.1} parent=1 // pred_check_branch
      %20 = sbr.rel (0) target = $region5
    $region4: #{revin_forward_fused.1} parent=1 // pred_region
      %s22 = ssub.s32 256, 256
      %23 = vsyncadd [#allocation3], %s22
      %s24 = sshll.u32 [#allocation2], 4
      %s25 = int_to_ptr.vmem [resolvable:$true] %s24
      %30 = dma.hbm_to_vmem [thread:$0]  %s0, 256, %s25, [#allocation3], 128, 128, 8
    $region5: #{revin_forward_fused.1} parent=1 // pred_fallthru
      _
    // Predicated region
    $region6: #{revin_forward_fused.1} parent=1 // pred_check
      _
    $region7: #{revin_forward_fused.1} parent=1 // pred_check_branch
      %32 = sbr.rel (0) target = $region9
    $region8: #{revin_forward_fused.1} parent=1 // pred_region
      %s34 = ssub.s32 256, 256
      %35 = vsyncadd [#allocation6], %s34
      %s36 = sshll.u32 [#allocation5], 4
      %s37 = int_to_ptr.vmem [resolvable:$true] %s36
      %42 = dma.hbm_to_vmem [thread:$0]  %s1, 256, %s37, [#allocation6], 128, 128, 8
    $region9: #{revin_forward_fused.1} parent=1 // pred_fallthru
      _
    // Predicated region
    $region10: #{revin_forward_fused.1} parent=1 // pred_check
      _
    $region11: #{revin_forward_fused.1} parent=1 // pred_check_branch
      %44 = sbr.rel (0) target = $region13
    $region12: #{revin_forward_fused.1} parent=1 // pred_region
      %s46 = ssub.s32 128, 128
      %47 = vsyncadd [#allocation6], %s46
      %s49 = sshll.u32 [#allocation7], 4
      %s50 = int_to_ptr.vmem [resolvable:$true] %s49
      %52 = dma.hbm_to_vmem [thread:$0]  %s2, 128, %s50, [#allocation6]
    $region13: #{revin_forward_fused.1} parent=1 // pred_fallthru
      _
    // Predicated region
    $region14: #{revin_forward_fused.1} parent=1 // pred_check
      _
    $region15: #{revin_forward_fused.1} parent=1 // pred_check_branch
      %54 = sbr.rel (0) target = $region17
    $region16: #{revin_forward_fused.1} parent=1 // pred_region
      %s56 = ssub.s32 128, 128
      %57 = vsyncadd [#allocation9], %s56
      %s59 = sshll.u32 [#allocation8], 4
      %s60 = int_to_ptr.vmem [resolvable:$true] %s59
      %62 = dma.hbm_to_vmem [thread:$0]  %s3, 128, %s60, [#allocation9]
    $region17: #{revin_forward_fused.1} parent=1 // pred_fallthru
      _
    // Predicated region
    $region18: #{revin_forward_fused.1} parent=1 // pred_check
      _
    $region19: #{revin_forward_fused.1} parent=1 // pred_check_branch
      %64 = sbr.rel (0) target = $region21
    $region20: #{revin_forward_fused.1} parent=1 // pred_region
      %65 = dma.done [#allocation3], 256
    $region21: #{revin_forward_fused.1} parent=1 // pred_fallthru
      _
    // Predicated region
    $region22: #{revin_forward_fused.1} parent=1 // pred_check
      _
    $region23: #{revin_forward_fused.1} parent=1 // pred_check_branch
      %67 = sbr.rel (0) target = $region25
    $region24: #{revin_forward_fused.1} parent=1 // pred_region
      %68 = dma.done [#allocation6], 256
    $region25: #{revin_forward_fused.1} parent=1 // pred_fallthru
      _
    // Predicated region
    $region26: #{revin_forward_fused.1} parent=1 // pred_check
      _
    $region27: #{revin_forward_fused.1} parent=1 // pred_check_branch
      %70 = sbr.rel (0) target = $region29
    $region28: #{revin_forward_fused.1} parent=1 // pred_region
      %71 = dma.done [#allocation6], 128
    $region29: #{revin_forward_fused.1} parent=1 // pred_fallthru
      _
    // Predicated region
    $region30: #{revin_forward_fused.1} parent=1 // pred_check
      _
    $region31: #{revin_forward_fused.1} parent=1 // pred_check_branch
      %73 = sbr.rel (0) target = $region33
    $region32: #{revin_forward_fused.1} parent=1 // pred_region
      %74 = dma.done [#allocation9], 128
    $region33: #{revin_forward_fused.1} parent=1 // pred_fallthru
      _
    %v75 = vld [vmem:[#allocation2] sm:$0xff]
    %v76 = vld [vmem:[#allocation2 + $0x8] sm:$0xff]
    %vm77 = vcmask 130048
    %v78 = vsel %vm77, %v75, 0.0
    %79 = vadd.xlane.f32.xlu0 %v78
    %v80 = vpop.xlane.xlu0 %79
    %v81 = vsel %vm77, %v76, 0.0
    %82 = vadd.xlane.f32.xlu0 %v81
    %v83 = vpop.xlane.xlu0 %82
    %v84 = vmul.f32 %v75, %v75
    %v85 = vmul.f32 %v76, %v76
    %v86 = vsel %vm77, %v84, 0.0
    %87 = vadd.xlane.f32.xlu0 %v86
    %v88 = vpop.xlane.xlu0 %87
    %v89 = vsel %vm77, %v85, 0.0
    %90 = vadd.xlane.f32.xlu0 %v89
    %v91 = vpop.xlane.xlu0 %90
    %v92 = vmul.f32 %v80, 0.0625
    %v93 = vmul.f32 %v83, 0.0625
    %v94 = vmul.f32 %v92, %v80
    %v95 = vmul.f32 %v93, %v83
    %v96 = vsub.f32 %v88, %v94
    %v97 = vsub.f32 %v91, %v95
    %v98 = vmul.f32 %v96, 0.06666667
    %v99 = vmul.f32 %v97, 0.06666667
    %v100 = vmax.f32 %v98, 0.0
    %v101 = vmax.f32 %v99, 0.0
    %v102 = vadd.f32 %v100, 1e-08
    %v103 = vadd.f32 %v101, 1e-08
    %v104 = vrsqrt.pop %v102
    %v105 = vrsqrt.pop %v103
    %v106 = vld [vmem:[#allocation7] sm:$0xff]
    %v107 = vmul.f32 %v104, %v106
    %v108 = vmul.f32 %v105, %v106
    %v109 = vld [vmem:[#allocation8] sm:$0xff]
    %v110 = vmul.f32 %v92, %v107
    %v111 = vmul.f32 %v93, %v108
    %v112 = vsub.f32 %v109, %v110
    %v113 = vsub.f32 %v109, %v111
    %115 = vset.pattern.permute.xlu0 0
    %116 = vperm.xlu0 %115, %v107
    %v117 = vpop.permute.xlu0 %116
    %120 = vset.pattern.permute.xlu0 0
    %121 = vperm.xlu0 %120, %v108
    %v122 = vpop.permute.xlu0 %121
    %v124 = vmul.f32 %v75, %v117
    %v125 = vmul.f32 %v76, %v122
    %127 = vset.pattern.permute.xlu0 0
    %128 = vperm.xlu0 %127, %v112
    %v129 = vpop.permute.xlu0 %128
    %132 = vset.pattern.permute.xlu0 0
    %133 = vperm.xlu0 %132, %v113
    %v134 = vpop.permute.xlu0 %133
    %v136 = vadd.f32 %v124, %v129
    %v137 = vadd.f32 %v125, %v134
    %138 = vst.msk [vmem:[#allocation10] sm:$0xff] %vm77, %v136
    %139 = vst.msk [vmem:[#allocation10 + $0x8] sm:$0xff] %vm77, %v137
    %v140 = vld [vmem:[#allocation5] sm:$0xff]
    %v141 = vld [vmem:[#allocation5 + $0x8] sm:$0xff]
    %v142 = vmul.f32 %v140, %v117
    %v143 = vmul.f32 %v141, %v122
    %v144 = vadd.f32 %v142, %v129
    %v145 = vadd.f32 %v143, %v134
    %vm146 = vcmask 64512
    %147 = vst.msk [vmem:[#allocation11] sm:$0xff] %vm146, %v144
    %148 = vst.msk [vmem:[#allocation11 + $0x8] sm:$0xff] %vm146, %v145
    %vm149 = vcmask 7168
    %150 = vst.msk [vmem:[#allocation13] sm:$0xff] %vm149, %v92
    %151 = vst.msk [vmem:[#allocation13 + $0x8] sm:$0xff] %vm149, %v93
    %152 = vst.msk [vmem:[#allocation14] sm:$0xff] %vm149, %v100
    %153 = vst.msk [vmem:[#allocation14 + $0x8] sm:$0xff] %vm149, %v101
    // Predicated region
    $region34: #{revin_forward_fused.1} parent=1 // pred_check
      _
    $region35: #{revin_forward_fused.1} parent=1 // pred_check_branch
      %155 = sbr.rel (0) target = $region37
    $region36: #{revin_forward_fused.1} parent=1 // pred_region
      %s157 = ssub.s32 256, 256
      %158 = vsyncadd [#allocation4], %s157
      %s159 = sshll.u32 [#allocation10], 4
      %s160 = int_to_ptr.vmem [resolvable:$true] %s159
      %165 = dma.vmem_to_hbm [thread:$0]  %s160, 256, %s4, [#allocation4], 128, 128, 8
    $region37: #{revin_forward_fused.1} parent=1 // pred_fallthru
      _
    // Predicated region
    $region38: #{revin_forward_fused.1} parent=1 // pred_check
      _
    $region39: #{revin_forward_fused.1} parent=1 // pred_check_branch
      %167 = sbr.rel (0) target = $region41
    $region40: #{revin_forward_fused.1} parent=1 // pred_region
      %s169 = ssub.s32 256, 256
      %170 = vsyncadd [#allocation12], %s169
      %s171 = sshll.u32 [#allocation11], 4
      %s172 = int_to_ptr.vmem [resolvable:$true] %s171
      %177 = dma.vmem_to_hbm [thread:$0]  %s172, 256, %s5, [#allocation12], 128, 128, 8
    $region41: #{revin_forward_fused.1} parent=1 // pred_fallthru
      _
    // Predicated region
    $region42: #{revin_forward_fused.1} parent=1 // pred_check
      _
    $region43: #{revin_forward_fused.1} parent=1 // pred_check_branch
      %179 = sbr.rel (0) target = $region45
    $region44: #{revin_forward_fused.1} parent=1 // pred_region
      %s181 = ssub.s32 256, 256
      %182 = vsyncadd [#allocation12], %s181
      %s183 = sshll.u32 [#allocation13], 4
      %s184 = int_to_ptr.vmem [resolvable:$true] %s183
      %189 = dma.vmem_to_hbm [thread:$0]  %s184, 256, %s6, [#allocation12], 128, 128, 8
    $region45: #{revin_forward_fused.1} parent=1 // pred_fallthru
      _
    // Predicated region
    $region46: #{revin_forward_fused.1} parent=1 // pred_check
      _
    $region47: #{revin_forward_fused.1} parent=1 // pred_check_branch
      %191 = sbr.rel (0) target = $region49
    $region48: #{revin_forward_fused.1} parent=1 // pred_region
      %s193 = ssub.s32 256, 256
      %194 = vsyncadd [#allocation15], %s193
      %s195 = sshll.u32 [#allocation14], 4
      %s196 = int_to_ptr.vmem [resolvable:$true] %s195
      %201 = dma.vmem_to_hbm [thread:$0]  %s196, 256, %s7, [#allocation15], 128, 128, 8
    $region49: #{revin_forward_fused.1} parent=1 // pred_fallthru
      _
    // Predicated region
    $region50: #{revin_forward_fused.1} parent=1 // pred_check
      _
    $region51: #{revin_forward_fused.1} parent=1 // pred_check_branch
      %203 = sbr.rel (0) target = $region53
    $region52: #{revin_forward_fused.1} parent=1 // pred_region
      %204 = dma.done [#allocation4], 256
    $region53: #{revin_forward_fused.1} parent=1 // pred_fallthru
      _
    // Predicated region
    $region54: #{revin_forward_fused.1} parent=1 // pred_check
      _
    $region55: #{revin_forward_fused.1} parent=1 // pred_check_branch
      %206 = sbr.rel (0) target = $region57
    $region56: #{revin_forward_fused.1} parent=1 // pred_region
      %207 = dma.done [#allocation12], 256
    $region57: #{revin_forward_fused.1} parent=1 // pred_fallthru
      _
    // Predicated region
    $region58: #{revin_forward_fused.1} parent=1 // pred_check
      _
    $region59: #{revin_forward_fused.1} parent=1 // pred_check_branch
      %209 = sbr.rel (0) target = $region61
    $region60: #{revin_forward_fused.1} parent=1 // pred_region
      %210 = dma.done [#allocation12], 256
    $region61: #{revin_forward_fused.1} parent=1 // pred_fallthru
      _
    // Predicated region
    $region62: #{revin_forward_fused.1} parent=1 // pred_check
      _
    $region63: #{revin_forward_fused.1} parent=1 // pred_check_branch
      %212 = sbr.rel (0) target = $region65
    $region64: #{revin_forward_fused.1} parent=1 // pred_region
      %213 = dma.done [#allocation15], 256
    $region65: #{revin_forward_fused.1} parent=1 // pred_fallthru
      _
    %214 = vsyncpa [#allocation3], 1
    %215 = vsyncpa [#allocation6], 1
    %216 = vsyncpa [#allocation9], 1
    %217 = vsyncpa [#allocation4], 1
    %218 = vsyncpa [#allocation12], 1
    %219 = vsyncpa [#allocation15], 1

</llo_original>
